<compile_context>
chip_gen: v7x
topology: tpu7x:2x2x1
jax: 0.10.0
libtpu: 0.0.40
codegen_flags: <defaults>
</compile_context>

<pallas_src>
from functools import partial

import jax
import jax.numpy as jnp
import numpy as np
from jax import lax
from jax.experimental import pallas as pl
from jax.experimental.pallas import tpu as pltpu


def _decoder_lstm_kernel(x_ref,            # VMEM (1, TT*B, H) bf16  (this chunk)
                         wih_ref,          # VMEM (H, 4H) bf16   (W_ih^T)
                         whh_ref,          # VMEM (H, 4H) bf16   (W_hh^T)
                         b_ref,            # VMEM (1, 4H) f32    (b_ih + b_hh)
                         h0_ref, c0_ref,   # VMEM (B, H) f32
                         out_ref,          # VMEM (1, TT*B, H) f32 (this chunk)
                         hT_ref, cT_ref,   # VMEM (B, H) f32 final LSTM state
                         h_sc, c_sc,       # VMEM scratch (B, H) f32, carried state
                         *, t_eff, t_pad):
    chunk = pl.program_id(0)
    B, H = h0_ref.shape
    TT = x_ref.shape[1] // B

    @pl.when(chunk == 0)
    def _():
        h_sc[...] = h0_ref[...]
        c_sc[...] = c0_ref[...]

    # Input projection for all TT timesteps of this chunk in a single MXU call,
    # bias folded in:  (TT*B, H) @ (H, 4H) -> (TT*B, 4H), f32 accumulation.
    # (nn.Dropout in eval/inference mode is identity -> nothing to apply.)
    xw = (jnp.dot(x_ref[0], wih_ref[...], preferred_element_type=jnp.float32)
          + b_ref[...])                                   # (TT*B, 4H) f32

    h = h_sc[...]
    c = c_sc[...]
    whh = whh_ref[...]

    # Statically unrolled recurrence over the TT timesteps of this chunk.
    # Only the recurrent (B, H) @ (H, 4H) dot remains per step.
    for tt in range(TT):
        gates = (xw[tt * B:(tt + 1) * B, :]
                 + jnp.dot(h.astype(whh.dtype), whh,
                           preferred_element_type=jnp.float32))   # (B, 4H)

        # PyTorch LSTM gate order: i, f, g, o.
        i = jax.nn.sigmoid(gates[:, 0 * H:1 * H])
        f = jax.nn.sigmoid(gates[:, 1 * H:2 * H])
        g = jnp.tanh(gates[:, 2 * H:3 * H])
        o = jax.nn.sigmoid(gates[:, 3 * H:4 * H])

        c_new = f * c + i * g
        h_new = o * jnp.tanh(c_new)

        if t_pad > t_eff:
            # Tail chunk may contain padded timesteps: freeze the carried state
            # there so (hT, cT) corresponds to the true last timestep.
            valid = ((chunk * TT + tt) < t_eff).astype(jnp.float32)
            h = valid * h_new + (1.0 - valid) * h
            c = valid * c_new + (1.0 - valid) * c
        else:
            h, c = h_new, c_new

        out_ref[0, tt * B:(tt + 1) * B, :] = h_new.astype(out_ref.dtype)

    h_sc[...] = h
    c_sc[...] = c

    @pl.when(chunk == pl.num_programs(0) - 1)
    def _():
        hT_ref[...] = h
        cT_ref[...] = c


def decoder_forward(tgt, dec_state, encoder_outputs, src_lengths, params, *,
                    tt_chunk=8):
    """JAX/Pallas equivalent of Decoder.forward (attn=None, eval-mode dropout)."""
    del encoder_outputs, src_lengths  # attn is None in this instantiation
    h0, c0 = dec_state
    # reshape_state: bidirectional-encoder state (2, B, Hb) -> (1, B, 2*Hb)
    if h0.shape[0] == 2:
        h0 = jnp.concatenate([h0[:-1], h0[1:]], axis=2)
        c0 = jnp.concatenate([c0[:-1], c0[1:]], axis=2)

    ids = tgt[:, :-1] if tgt.shape[1] > 1 else tgt
    ids = ids.astype(jnp.int32)
    B, t_eff = ids.shape

    emb = params["embedding"]                     # (V, H)
    H = emb.shape[1]

    # Embedding lookup in the wrapper (cheap XLA gather in HBM); kernel streams
    # activation chunks instead of holding the (V, H) table in VMEM.
    x = jnp.take(emb, ids, axis=0)                # (B, T_eff, H)
    x = jnp.transpose(x, (1, 0, 2))               # (T_eff, B, H) time-major

    TT = max(1, min(tt_chunk, t_eff))
    num_chunks = pl.cdiv(t_eff, TT)
    t_pad = num_chunks * TT
    if t_pad != t_eff:
        x = jnp.pad(x, ((0, t_pad - t_eff), (0, 0), (0, 0)))

    # (num_chunks, TT*B, H): one dense rectangular tile per grid step.
    x = x.reshape(num_chunks, TT * B, H).astype(jnp.bfloat16)

    wih_t = jnp.transpose(params["w_ih"]).astype(jnp.bfloat16)   # (H, 4H)
    whh_t = jnp.transpose(params["w_hh"]).astype(jnp.bfloat16)   # (H, 4H)
    b2 = (params["b_ih"] + params["b_hh"]).reshape(1, 4 * H).astype(jnp.float32)

    h0_in = h0[0].astype(jnp.float32)
    c0_in = c0[0].astype(jnp.float32)

    kernel = partial(_decoder_lstm_kernel, t_eff=t_eff, t_pad=t_pad)

    grid_spec = pltpu.PrefetchScalarGridSpec(
        num_scalar_prefetch=0,
        grid=(num_chunks,),
        in_specs=[
            pl.BlockSpec((1, TT * B, H), lambda c: (c, 0, 0)),   # streamed x chunk
            pl.BlockSpec((H, 4 * H), lambda c: (0, 0)),          # invariant weights
            pl.BlockSpec((H, 4 * H), lambda c: (0, 0)),
            pl.BlockSpec((1, 4 * H), lambda c: (0, 0)),
            pl.BlockSpec((B, H), lambda c: (0, 0)),
            pl.BlockSpec((B, H), lambda c: (0, 0)),
        ],
        out_specs=[
            pl.BlockSpec((1, TT * B, H), lambda c: (c, 0, 0)),
            pl.BlockSpec((B, H), lambda c: (0, 0)),
            pl.BlockSpec((B, H), lambda c: (0, 0)),
        ],
        scratch_shapes=[pltpu.VMEM((B, H), jnp.float32),
                        pltpu.VMEM((B, H), jnp.float32)],
    )

    out_flat, hT, cT = pl.pallas_call(
        kernel,
        grid_spec=grid_spec,
        out_shape=(
            jax.ShapeDtypeStruct((num_chunks, TT * B, H), jnp.float32),
            jax.ShapeDtypeStruct((B, H), jnp.float32),
            jax.ShapeDtypeStruct((B, H), jnp.float32),
        ),
        compiler_params=pltpu.CompilerParams(
            dimension_semantics=("arbitrary",)),   # recurrent -> sequential grid
    )(x, wih_t, whh_t, b2, h0_in, c0_in)

    out_tbh = out_flat.reshape(t_pad, B, H)[:t_eff]          # drop padded tail
    outputs = jnp.transpose(out_tbh, (1, 0, 2))              # (B, T_eff, H)
    # attn is None; output dropout is identity in eval mode.
    return outputs, (hT[None], cT[None])


def init_params(key, V, H, padding_idx):
    k1, k2, k3, k4, k5 = jax.random.split(key, 5)
    emb = jax.random.normal(k1, (V, H), jnp.float32)
    emb = emb.at[padding_idx].set(0.0)             # nn.Embedding padding_idx row
    s = 1.0 / np.sqrt(H)
    w_ih = jax.random.uniform(k2, (4 * H, H), jnp.float32, -s, s)
    w_hh = jax.random.uniform(k3, (4 * H, H), jnp.float32, -s, s)
    b_ih = jax.random.uniform(k4, (4 * H,), jnp.float32, -s, s)
    b_hh = jax.random.uniform(k5, (4 * H,), jnp.float32, -s, s)
    return dict(embedding=emb, w_ih=w_ih, w_hh=w_hh, b_ih=b_ih, b_hh=b_hh)


def _reference_forward(tgt, dec_state, params):
    """Pure-JAX reference (PyTorch LSTM math, eval-mode dropout) mirroring the
    kernel precision: bf16 matmul operands, f32 accumulation + gate math."""
    h0, c0 = dec_state
    ids = tgt[:, :-1] if tgt.shape[1] > 1 else tgt
    x = jnp.take(params["embedding"], ids, axis=0).astype(jnp.bfloat16)  # (B,T,H)
    w_ih = params["w_ih"].astype(jnp.bfloat16)
    w_hh = params["w_hh"].astype(jnp.bfloat16)
    b = (params["b_ih"] + params["b_hh"]).astype(jnp.float32)
    H = params["w_hh"].shape[1]

    def step(carry, x_t):
        h, c = carry
        gates = (jnp.dot(x_t, w_ih.T, preferred_element_type=jnp.float32)
                 + jnp.dot(h.astype(jnp.bfloat16), w_hh.T,
                           preferred_element_type=jnp.float32)
                 + b)
        i = jax.nn.sigmoid(gates[:, 0 * H:1 * H])
        f = jax.nn.sigmoid(gates[:, 1 * H:2 * H])
        g = jnp.tanh(gates[:, 2 * H:3 * H])
        o = jax.nn.sigmoid(gates[:, 3 * H:4 * H])
        c = f * c + i * g
        h = o * jnp.tanh(c)
        return (h, c), h

    (hT, cT), ys = lax.scan(step, (h0[0], c0[0]), jnp.transpose(x, (1, 0, 2)))
    return jnp.transpose(ys, (1, 0, 2)), (hT[None], cT[None])


if __name__ == "__main__":
    B, T, V, H = 2, 8, 16, 32
    padding_idx = 0

    key = jax.random.PRNGKey(0)
    kp, kt, kh, kc = jax.random.split(key, 4)
    params = init_params(kp, V, H, padding_idx)

    tgt = jax.random.randint(kt, (B, T), 0, V, dtype=jnp.int32)
    h0 = jax.random.normal(kh, (1, B, H), jnp.float32)
    c0 = jax.random.normal(kc, (1, B, H), jnp.float32)
    encoder_outputs = jnp.zeros((B, T, H), jnp.float32)  # unused (attn=None)
    src_lengths = jnp.full((B,), T, jnp.int32)           # unused (attn=None)

    ref_out, (ref_h, ref_c) = _reference_forward(tgt, (h0, c0), params)

    # tt_chunk=4 exercises multi-chunk state carry (2 grid steps) plus the
    # padded-tail masking path at the toy T_eff=7; tt_chunk=8 exercises the
    # single-chunk / no-padding path.
    for chunk in (4, 8):
        outputs, (hT, cT) = decoder_forward(
            tgt, (h0, c0), encoder_outputs, src_lengths, params, tt_chunk=chunk)
        jax.block_until_ready((outputs, hT, cT))

        np.testing.assert_allclose(np.asarray(outputs), np.asarray(ref_out),
                                   rtol=1e-3, atol=1e-3)
        np.testing.assert_allclose(np.asarray(hT), np.asarray(ref_h),
                                   rtol=1e-3, atol=1e-3)
        np.testing.assert_allclose(np.asarray(cT), np.asarray(ref_c),
                                   rtol=1e-3, atol=1e-3)
        assert outputs.shape == (B, T - 1, H)
        assert hT.shape == (1, B, H) and cT.shape == (1, B, H)

    print("KERNEL_OK")
</pallas_src>

<mosaic_0001>
module attributes {stable_mosaic.version = 11 : i64} {
  func.func @_decoder_lstm_kernel(%arg0: i32, %arg1: memref<1x8x32xbf16, #tpu.memory_space<vmem>>, %arg2: memref<32x128xbf16, #tpu.memory_space<vmem>>, %arg3: memref<32x128xbf16, #tpu.memory_space<vmem>>, %arg4: memref<1x128xf32, #tpu.memory_space<vmem>>, %arg5: memref<2x32xf32, #tpu.memory_space<vmem>>, %arg6: memref<2x32xf32, #tpu.memory_space<vmem>>, %arg7: memref<1x8x32xf32, #tpu.memory_space<vmem>>, %arg8: memref<2x32xf32, #tpu.memory_space<vmem>>, %arg9: memref<2x32xf32, #tpu.memory_space<vmem>>, %arg10: memref<2x32xf32, #tpu.memory_space<vmem>>, %arg11: memref<2x32xf32, #tpu.memory_space<vmem>>) attributes {dimension_semantics = [#tpu.dimension_semantics<arbitrary>], iteration_bounds = array<i64: 2>, scalar_prefetch = 0 : i64, scratch_operands = 2 : i64, tpu.core_type = #tpu.core_type<tc>, window_params = [{transform_indices = @transform_0, window_bounds = array<i64: 1, 8, 32>}, {pipeline_mode = #tpu.pipeline_mode<synchronous>, transform_indices = @transform_1, window_bounds = array<i64: 32, 128>}, {pipeline_mode = #tpu.pipeline_mode<synchronous>, transform_indices = @transform_2, window_bounds = array<i64: 32, 128>}, {pipeline_mode = #tpu.pipeline_mode<synchronous>, transform_indices = @transform_3, window_bounds = array<i64: 1, 128>}, {pipeline_mode = #tpu.pipeline_mode<synchronous>, transform_indices = @transform_4, window_bounds = array<i64: 2, 32>}, {pipeline_mode = #tpu.pipeline_mode<synchronous>, transform_indices = @transform_5, window_bounds = array<i64: 2, 32>}, {transform_indices = @transform_6, window_bounds = array<i64: 1, 8, 32>}, {pipeline_mode = #tpu.pipeline_mode<synchronous>, transform_indices = @transform_7, window_bounds = array<i64: 2, 32>}, {pipeline_mode = #tpu.pipeline_mode<synchronous>, transform_indices = @transform_8, window_bounds = array<i64: 2, 32>}]} {
    %c0_i32 = arith.constant 0 : i32
    %0 = arith.cmpi eq, %arg0, %c0_i32 : i32
    %1 = arith.extui %0 : i1 to i32
    %c0_i32_0 = arith.constant 0 : i32
    %2 = arith.cmpi ne, %1, %c0_i32_0 : i32
    scf.if %2 {
      %c0_59 = arith.constant 0 : index
      %c0_60 = arith.constant 0 : index
      %214 = vector.load %arg5[%c0_59, %c0_60] : memref<2x32xf32, #tpu.memory_space<vmem>>, vector<2x32xf32>
      %c0_61 = arith.constant 0 : index
      %c0_62 = arith.constant 0 : index
      %215 = vector.load %arg10[%c0_61, %c0_62] : memref<2x32xf32, #tpu.memory_space<vmem>>, vector<2x32xf32>
      tpu.vector_store %arg10[%c0_61, %c0_62], %214 {strides = array<i32>} : memref<2x32xf32, #tpu.memory_space<vmem>>, vector<2x32xf32>,
      %c0_63 = arith.constant 0 : index
      %c0_64 = arith.constant 0 : index
      %216 = vector.load %arg6[%c0_63, %c0_64] : memref<2x32xf32, #tpu.memory_space<vmem>>, vector<2x32xf32>
      %c0_65 = arith.constant 0 : index
      %c0_66 = arith.constant 0 : index
      %217 = vector.load %arg11[%c0_65, %c0_66] : memref<2x32xf32, #tpu.memory_space<vmem>>, vector<2x32xf32>
      tpu.vector_store %arg11[%c0_65, %c0_66], %216 {strides = array<i32>} : memref<2x32xf32, #tpu.memory_space<vmem>>, vector<2x32xf32>,
    } else {
    }
    %c0 = arith.constant 0 : index
    %c0_1 = arith.constant 0 : index
    %c0_2 = arith.constant 0 : index
    %3 = vector.load %arg1[%c0, %c0_1, %c0_2] : memref<1x8x32xbf16, #tpu.memory_space<vmem>>, vector<1x8x32xbf16>
    %4 = vector.shape_cast %3 : vector<1x8x32xbf16> to vector<8x32xbf16>
    %c0_3 = arith.constant 0 : index
    %c0_4 = arith.constant 0 : index
    %5 = vector.load %arg2[%c0_3, %c0_4] : memref<32x128xbf16, #tpu.memory_space<vmem>>, vector<32x128xbf16>
    %cst = arith.constant dense<0.000000e+00> : vector<8x128xf32>
    %6 = tpu.matmul %4, %5, %cst {dimension_numbers = #tpu.dot_dimension_numbers<[1], [0], [0], [1], [0, 0, 1, 1], [], []>} : vector<8x32xbf16>, vector<32x128xbf16>, vector<8x128xf32> -> vector<8x128xf32>
    %c0_5 = arith.constant 0 : index
    %c0_6 = arith.constant 0 : index
    %7 = vector.load %arg4[%c0_5, %c0_6] : memref<1x128xf32, #tpu.memory_space<vmem>>, vector<1x128xf32>
    %8 = vector.broadcast %7 : vector<1x128xf32> to vector<8x128xf32>
    %9 = arith.addf %6, %8 : vector<8x128xf32>
    %c0_7 = arith.constant 0 : index
    %c0_8 = arith.constant 0 : index
    %10 = vector.load %arg10[%c0_7, %c0_8] : memref<2x32xf32, #tpu.memory_space<vmem>>, vector<2x32xf32>
    %c0_9 = arith.constant 0 : index
    %c0_10 = arith.constant 0 : index
    %11 = vector.load %arg11[%c0_9, %c0_10] : memref<2x32xf32, #tpu.memory_space<vmem>>, vector<2x32xf32>
    %c0_11 = arith.constant 0 : index
    %c0_12 = arith.constant 0 : index
    %12 = vector.load %arg3[%c0_11, %c0_12] : memref<32x128xbf16, #tpu.memory_space<vmem>>, vector<32x128xbf16>
    %13 = vector.extract_strided_slice %9 {offsets = [0, 0], sizes = [2, 128], strides = [1, 1]} : vector<8x128xf32> to vector<2x128xf32>
    %14 = arith.truncf %10 : vector<2x32xf32> to vector<2x32xbf16>
    %cst_13 = arith.constant dense<0.000000e+00> : vector<2x128xf32>
    %15 = tpu.matmul %14, %12, %cst_13 {dimension_numbers = #tpu.dot_dimension_numbers<[1], [0], [0], [1], [0, 0, 1, 1], [], []>} : vector<2x32xbf16>, vector<32x128xbf16>, vector<2x128xf32> -> vector<2x128xf32>
    %16 = arith.addf %13, %15 : vector<2x128xf32>
    %17 = vector.extract_strided_slice %16 {offsets = [0, 0], sizes = [2, 32], strides = [1, 1]} : vector<2x128xf32> to vector<2x32xf32>
    %18 = arith.negf %17 : vector<2x32xf32>
    %19 = math.exp %18 : vector<2x32xf32>
    %cst_14 = arith.constant 1.000000e+00 : f32
    %20 = vector.broadcast %cst_14 : f32 to vector<2x32xf32>
    %21 = arith.addf %20, %19 : vector<2x32xf32>
    %22 = arith.divf %20, %21 : vector<2x32xf32>
    %23 = vector.extract_strided_slice %16 {offsets = [0, 32], sizes = [2, 32], strides = [1, 1]} : vector<2x128xf32> to vector<2x32xf32>
    %24 = arith.negf %23 : vector<2x32xf32>
    %25 = math.exp %24 : vector<2x32xf32>
    %cst_15 = arith.constant 1.000000e+00 : f32
    %26 = vector.broadcast %cst_15 : f32 to vector<2x32xf32>
    %27 = arith.addf %26, %25 : vector<2x32xf32>
    %28 = arith.divf %26, %27 : vector<2x32xf32>
    %29 = vector.extract_strided_slice %16 {offsets = [0, 64], sizes = [2, 32], strides = [1, 1]} : vector<2x128xf32> to vector<2x32xf32>
    %30 = math.tanh %29 : vector<2x32xf32>
    %31 = vector.extract_strided_slice %16 {offsets = [0, 96], sizes = [2, 32], strides = [1, 1]} : vector<2x128xf32> to vector<2x32xf32>
    %32 = arith.negf %31 : vector<2x32xf32>
    %33 = math.exp %32 : vector<2x32xf32>
    %cst_16 = arith.constant 1.000000e+00 : f32
    %34 = vector.broadcast %cst_16 : f32 to vector<2x32xf32>
    %35 = arith.addf %34, %33 : vector<2x32xf32>
    %36 = arith.divf %34, %35 : vector<2x32xf32>
    %37 = arith.mulf %28, %11 : vector<2x32xf32>
    %38 = arith.mulf %22, %30 : vector<2x32xf32>
    %39 = arith.addf %37, %38 : vector<2x32xf32>
    %40 = math.tanh %39 : vector<2x32xf32>
    %41 = arith.mulf %36, %40 : vector<2x32xf32>
    %c4_i32 = arith.constant 4 : i32
    %42 = arith.muli %arg0, %c4_i32 : i32
    %c0_i32_17 = arith.constant 0 : i32
    %43 = arith.addi %42, %c0_i32_17 : i32
    %c7_i32 = arith.constant 7 : i32
    %44 = arith.cmpi slt, %43, %c7_i32 : i32
    %45 = arith.extui %44 : i1 to i32
    %46 = arith.sitofp %45 : i32 to f32
    %47 = vector.broadcast %46 : f32 to vector<2x32xf32>
    %48 = arith.mulf %47, %41 : vector<2x32xf32>
    %cst_18 = arith.constant 1.000000e+00 : f32
    %49 = arith.subf %cst_18, %46 : f32
    %50 = vector.broadcast %49 : f32 to vector<2x32xf32>
    %51 = arith.mulf %50, %10 : vector<2x32xf32>
    %52 = arith.addf %48, %51 : vector<2x32xf32>
    %53 = vector.broadcast %46 : f32 to vector<2x32xf32>
    %54 = arith.mulf %53, %39 : vector<2x32xf32>
    %cst_19 = arith.constant 1.000000e+00 : f32
    %55 = arith.subf %cst_19, %46 : f32
    %56 = vector.broadcast %55 : f32 to vector<2x32xf32>
    %57 = arith.mulf %56, %11 : vector<2x32xf32>
    %58 = arith.addf %54, %57 : vector<2x32xf32>
    %c0_20 = arith.constant 0 : index
    %c0_21 = arith.constant 0 : index
    %c0_22 = arith.constant 0 : index
    %59 = vector.load %arg7[%c0_20, %c0_21, %c0_22] : memref<1x8x32xf32, #tpu.memory_space<vmem>>, vector<1x2x32xf32>
    %60 = vector.shape_cast %59 : vector<1x2x32xf32> to vector<2x32xf32>
    %61 = vector.shape_cast %41 : vector<2x32xf32> to vector<1x2x32xf32>
    tpu.vector_store %arg7[%c0_20, %c0_21, %c0_22], %61 {strides = array<i32>} : memref<1x8x32xf32, #tpu.memory_space<vmem>>, vector<1x2x32xf32>,
    %62 = vector.extract_strided_slice %9 {offsets = [2, 0], sizes = [2, 128], strides = [1, 1]} : vector<8x128xf32> to vector<2x128xf32>
    %63 = arith.truncf %52 : vector<2x32xf32> to vector<2x32xbf16>
    %cst_23 = arith.constant dense<0.000000e+00> : vector<2x128xf32>
    %64 = tpu.matmul %63, %12, %cst_23 {dimension_numbers = #tpu.dot_dimension_numbers<[1], [0], [0], [1], [0, 0, 1, 1], [], []>} : vector<2x32xbf16>, vector<32x128xbf16>, vector<2x128xf32> -> vector<2x128xf32>
    %65 = arith.addf %62, %64 : vector<2x128xf32>
    %66 = vector.extract_strided_slice %65 {offsets = [0, 0], sizes = [2, 32], strides = [1, 1]} : vector<2x128xf32> to vector<2x32xf32>
    %67 = arith.negf %66 : vector<2x32xf32>
    %68 = math.exp %67 : vector<2x32xf32>
    %cst_24 = arith.constant 1.000000e+00 : f32
    %69 = vector.broadcast %cst_24 : f32 to vector<2x32xf32>
    %70 = arith.addf %69, %68 : vector<2x32xf32>
    %71 = arith.divf %69, %70 : vector<2x32xf32>
    %72 = vector.extract_strided_slice %65 {offsets = [0, 32], sizes = [2, 32], strides = [1, 1]} : vector<2x128xf32> to vector<2x32xf32>
    %73 = arith.negf %72 : vector<2x32xf32>
    %74 = math.exp %73 : vector<2x32xf32>
    %cst_25 = arith.constant 1.000000e+00 : f32
    %75 = vector.broadcast %cst_25 : f32 to vector<2x32xf32>
    %76 = arith.addf %75, %74 : vector<2x32xf32>
    %77 = arith.divf %75, %76 : vector<2x32xf32>
    %78 = vector.extract_strided_slice %65 {offsets = [0, 64], sizes = [2, 32], strides = [1, 1]} : vector<2x128xf32> to vector<2x32xf32>
    %79 = math.tanh %78 : vector<2x32xf32>
    %80 = vector.extract_strided_slice %65 {offsets = [0, 96], sizes = [2, 32], strides = [1, 1]} : vector<2x128xf32> to vector<2x32xf32>
    %81 = arith.negf %80 : vector<2x32xf32>
    %82 = math.exp %81 : vector<2x32xf32>
    %cst_26 = arith.constant 1.000000e+00 : f32
    %83 = vector.broadcast %cst_26 : f32 to vector<2x32xf32>
    %84 = arith.addf %83, %82 : vector<2x32xf32>
    %85 = arith.divf %83, %84 : vector<2x32xf32>
    %86 = arith.mulf %77, %58 : vector<2x32xf32>
    %87 = arith.mulf %71, %79 : vector<2x32xf32>
    %88 = arith.addf %86, %87 : vector<2x32xf32>
    %89 = math.tanh %88 : vector<2x32xf32>
    %90 = arith.mulf %85, %89 : vector<2x32xf32>
    %c4_i32_27 = arith.constant 4 : i32
    %91 = arith.muli %arg0, %c4_i32_27 : i32
    %c1_i32 = arith.constant 1 : i32
    %92 = arith.addi %91, %c1_i32 : i32
    %c7_i32_28 = arith.constant 7 : i32
    %93 = arith.cmpi slt, %92, %c7_i32_28 : i32
    %94 = arith.extui %93 : i1 to i32
    %95 = arith.sitofp %94 : i32 to f32
    %96 = vector.broadcast %95 : f32 to vector<2x32xf32>
    %97 = arith.mulf %96, %90 : vector<2x32xf32>
    %cst_29 = arith.constant 1.000000e+00 : f32
    %98 = arith.subf %cst_29, %95 : f32
    %99 = vector.broadcast %98 : f32 to vector<2x32xf32>
    %100 = arith.mulf %99, %52 : vector<2x32xf32>
    %101 = arith.addf %97, %100 : vector<2x32xf32>
    %102 = vector.broadcast %95 : f32 to vector<2x32xf32>
    %103 = arith.mulf %102, %88 : vector<2x32xf32>
    %cst_30 = arith.constant 1.000000e+00 : f32
    %104 = arith.subf %cst_30, %95 : f32
    %105 = vector.broadcast %104 : f32 to vector<2x32xf32>
    %106 = arith.mulf %105, %58 : vector<2x32xf32>
    %107 = arith.addf %103, %106 : vector<2x32xf32>
    %c0_31 = arith.constant 0 : index
    %c2 = arith.constant 2 : index
    %c0_32 = arith.constant 0 : index
    %108 = vector.load %arg7[%c0_31, %c2, %c0_32] : memref<1x8x32xf32, #tpu.memory_space<vmem>>, vector<1x2x32xf32>
    %109 = vector.shape_cast %108 : vector<1x2x32xf32> to vector<2x32xf32>
    %110 = vector.shape_cast %90 : vector<2x32xf32> to vector<1x2x32xf32>
    tpu.vector_store %arg7[%c0_31, %c2, %c0_32], %110 {strides = array<i32>} : memref<1x8x32xf32, #tpu.memory_space<vmem>>, vector<1x2x32xf32>,
    %111 = vector.extract_strided_slice %9 {offsets = [4, 0], sizes = [2, 128], strides = [1, 1]} : vector<8x128xf32> to vector<2x128xf32>
    %112 = arith.truncf %101 : vector<2x32xf32> to vector<2x32xbf16>
    %cst_33 = arith.constant dense<0.000000e+00> : vector<2x128xf32>
    %113 = tpu.matmul %112, %12, %cst_33 {dimension_numbers = #tpu.dot_dimension_numbers<[1], [0], [0], [1], [0, 0, 1, 1], [], []>} : vector<2x32xbf16>, vector<32x128xbf16>, vector<2x128xf32> -> vector<2x128xf32>
    %114 = arith.addf %111, %113 : vector<2x128xf32>
    %115 = vector.extract_strided_slice %114 {offsets = [0, 0], sizes = [2, 32], strides = [1, 1]} : vector<2x128xf32> to vector<2x32xf32>
    %116 = arith.negf %115 : vector<2x32xf32>
    %117 = math.exp %116 : vector<2x32xf32>
    %cst_34 = arith.constant 1.000000e+00 : f32
    %118 = vector.broadcast %cst_34 : f32 to vector<2x32xf32>
    %119 = arith.addf %118, %117 : vector<2x32xf32>
    %120 = arith.divf %118, %119 : vector<2x32xf32>
    %121 = vector.extract_strided_slice %114 {offsets = [0, 32], sizes = [2, 32], strides = [1, 1]} : vector<2x128xf32> to vector<2x32xf32>
    %122 = arith.negf %121 : vector<2x32xf32>
    %123 = math.exp %122 : vector<2x32xf32>
    %cst_35 = arith.constant 1.000000e+00 : f32
    %124 = vector.broadcast %cst_35 : f32 to vector<2x32xf32>
    %125 = arith.addf %124, %123 : vector<2x32xf32>
    %126 = arith.divf %124, %125 : vector<2x32xf32>
    %127 = vector.extract_strided_slice %114 {offsets = [0, 64], sizes = [2, 32], strides = [1, 1]} : vector<2x128xf32> to vector<2x32xf32>
    %128 = math.tanh %127 : vector<2x32xf32>
    %129 = vector.extract_strided_slice %114 {offsets = [0, 96], sizes = [2, 32], strides = [1, 1]} : vector<2x128xf32> to vector<2x32xf32>
    %130 = arith.negf %129 : vector<2x32xf32>
    %131 = math.exp %130 : vector<2x32xf32>
    %cst_36 = arith.constant 1.000000e+00 : f32
    %132 = vector.broadcast %cst_36 : f32 to vector<2x32xf32>
    %133 = arith.addf %132, %131 : vector<2x32xf32>
    %134 = arith.divf %132, %133 : vector<2x32xf32>
    %135 = arith.mulf %126, %107 : vector<2x32xf32>
    %136 = arith.mulf %120, %128 : vector<2x32xf32>
    %137 = arith.addf %135, %136 : vector<2x32xf32>
    %138 = math.tanh %137 : vector<2x32xf32>
    %139 = arith.mulf %134, %138 : vector<2x32xf32>
    %c4_i32_37 = arith.constant 4 : i32
    %140 = arith.muli %arg0, %c4_i32_37 : i32
    %c2_i32 = arith.constant 2 : i32
    %141 = arith.addi %140, %c2_i32 : i32
    %c7_i32_38 = arith.constant 7 : i32
    %142 = arith.cmpi slt, %141, %c7_i32_38 : i32
    %143 = arith.extui %142 : i1 to i32
    %144 = arith.sitofp %143 : i32 to f32
    %145 = vector.broadcast %144 : f32 to vector<2x32xf32>
    %146 = arith.mulf %145, %139 : vector<2x32xf32>
    %cst_39 = arith.constant 1.000000e+00 : f32
    %147 = arith.subf %cst_39, %144 : f32
    %148 = vector.broadcast %147 : f32 to vector<2x32xf32>
    %149 = arith.mulf %148, %101 : vector<2x32xf32>
    %150 = arith.addf %146, %149 : vector<2x32xf32>
    %151 = vector.broadcast %144 : f32 to vector<2x32xf32>
    %152 = arith.mulf %151, %137 : vector<2x32xf32>
    %cst_40 = arith.constant 1.000000e+00 : f32
    %153 = arith.subf %cst_40, %144 : f32
    %154 = vector.broadcast %153 : f32 to vector<2x32xf32>
    %155 = arith.mulf %154, %107 : vector<2x32xf32>
    %156 = arith.addf %152, %155 : vector<2x32xf32>
    %c0_41 = arith.constant 0 : index
    %c4 = arith.constant 4 : index
    %c0_42 = arith.constant 0 : index
    %157 = vector.load %arg7[%c0_41, %c4, %c0_42] : memref<1x8x32xf32, #tpu.memory_space<vmem>>, vector<1x2x32xf32>
    %158 = vector.shape_cast %157 : vector<1x2x32xf32> to vector<2x32xf32>
    %159 = vector.shape_cast %139 : vector<2x32xf32> to vector<1x2x32xf32>
    tpu.vector_store %arg7[%c0_41, %c4, %c0_42], %159 {strides = array<i32>} : memref<1x8x32xf32, #tpu.memory_space<vmem>>, vector<1x2x32xf32>,
    %160 = vector.extract_strided_slice %9 {offsets = [6, 0], sizes = [2, 128], strides = [1, 1]} : vector<8x128xf32> to vector<2x128xf32>
    %161 = arith.truncf %150 : vector<2x32xf32> to vector<2x32xbf16>
    %cst_43 = arith.constant dense<0.000000e+00> : vector<2x128xf32>
    %162 = tpu.matmul %161, %12, %cst_43 {dimension_numbers = #tpu.dot_dimension_numbers<[1], [0], [0], [1], [0, 0, 1, 1], [], []>} : vector<2x32xbf16>, vector<32x128xbf16>, vector<2x128xf32> -> vector<2x128xf32>
    %163 = arith.addf %160, %162 : vector<2x128xf32>
    %164 = vector.extract_strided_slice %163 {offsets = [0, 0], sizes = [2, 32], strides = [1, 1]} : vector<2x128xf32> to vector<2x32xf32>
    %165 = arith.negf %164 : vector<2x32xf32>
    %166 = math.exp %165 : vector<2x32xf32>
    %cst_44 = arith.constant 1.000000e+00 : f32
    %167 = vector.broadcast %cst_44 : f32 to vector<2x32xf32>
    %168 = arith.addf %167, %166 : vector<2x32xf32>
    %169 = arith.divf %167, %168 : vector<2x32xf32>
    %170 = vector.extract_strided_slice %163 {offsets = [0, 32], sizes = [2, 32], strides = [1, 1]} : vector<2x128xf32> to vector<2x32xf32>
    %171 = arith.negf %170 : vector<2x32xf32>
    %172 = math.exp %171 : vector<2x32xf32>
    %cst_45 = arith.constant 1.000000e+00 : f32
    %173 = vector.broadcast %cst_45 : f32 to vector<2x32xf32>
    %174 = arith.addf %173, %172 : vector<2x32xf32>
    %175 = arith.divf %173, %174 : vector<2x32xf32>
    %176 = vector.extract_strided_slice %163 {offsets = [0, 64], sizes = [2, 32], strides = [1, 1]} : vector<2x128xf32> to vector<2x32xf32>
    %177 = math.tanh %176 : vector<2x32xf32>
    %178 = vector.extract_strided_slice %163 {offsets = [0, 96], sizes = [2, 32], strides = [1, 1]} : vector<2x128xf32> to vector<2x32xf32>
    %179 = arith.negf %178 : vector<2x32xf32>
    %180 = math.exp %179 : vector<2x32xf32>
    %cst_46 = arith.constant 1.000000e+00 : f32
    %181 = vector.broadcast %cst_46 : f32 to vector<2x32xf32>
    %182 = arith.addf %181, %180 : vector<2x32xf32>
    %183 = arith.divf %181, %182 : vector<2x32xf32>
    %184 = arith.mulf %175, %156 : vector<2x32xf32>
    %185 = arith.mulf %169, %177 : vector<2x32xf32>
    %186 = arith.addf %184, %185 : vector<2x32xf32>
    %187 = math.tanh %186 : vector<2x32xf32>
    %188 = arith.mulf %183, %187 : vector<2x32xf32>
    %c4_i32_47 = arith.constant 4 : i32
    %189 = arith.muli %arg0, %c4_i32_47 : i32
    %c3_i32 = arith.constant 3 : i32
    %190 = arith.addi %189, %c3_i32 : i32
    %c7_i32_48 = arith.constant 7 : i32
    %191 = arith.cmpi slt, %190, %c7_i32_48 : i32
    %192 = arith.extui %191 : i1 to i32
    %193 = arith.sitofp %192 : i32 to f32
    %194 = vector.broadcast %193 : f32 to vector<2x32xf32>
    %195 = arith.mulf %194, %188 : vector<2x32xf32>
    %cst_49 = arith.constant 1.000000e+00 : f32
    %196 = arith.subf %cst_49, %193 : f32
    %197 = vector.broadcast %196 : f32 to vector<2x32xf32>
    %198 = arith.mulf %197, %150 : vector<2x32xf32>
    %199 = arith.addf %195, %198 : vector<2x32xf32>
    %200 = vector.broadcast %193 : f32 to vector<2x32xf32>
    %201 = arith.mulf %200, %186 : vector<2x32xf32>
    %cst_50 = arith.constant 1.000000e+00 : f32
    %202 = arith.subf %cst_50, %193 : f32
    %203 = vector.broadcast %202 : f32 to vector<2x32xf32>
    %204 = arith.mulf %203, %156 : vector<2x32xf32>
    %205 = arith.addf %201, %204 : vector<2x32xf32>
    %c0_51 = arith.constant 0 : index
    %c6 = arith.constant 6 : index
    %c0_52 = arith.constant 0 : index
    %206 = vector.load %arg7[%c0_51, %c6, %c0_52] : memref<1x8x32xf32, #tpu.memory_space<vmem>>, vector<1x2x32xf32>
    %207 = vector.shape_cast %206 : vector<1x2x32xf32> to vector<2x32xf32>
    %208 = vector.shape_cast %188 : vector<2x32xf32> to vector<1x2x32xf32>
    tpu.vector_store %arg7[%c0_51, %c6, %c0_52], %208 {strides = array<i32>} : memref<1x8x32xf32, #tpu.memory_space<vmem>>, vector<1x2x32xf32>,
    %c0_53 = arith.constant 0 : index
    %c0_54 = arith.constant 0 : index
    %209 = vector.load %arg10[%c0_53, %c0_54] : memref<2x32xf32, #tpu.memory_space<vmem>>, vector<2x32xf32>
    tpu.vector_store %arg10[%c0_53, %c0_54], %199 {strides = array<i32>} : memref<2x32xf32, #tpu.memory_space<vmem>>, vector<2x32xf32>,
    %c0_55 = arith.constant 0 : index
    %c0_56 = arith.constant 0 : index
    %210 = vector.load %arg11[%c0_55, %c0_56] : memref<2x32xf32, #tpu.memory_space<vmem>>, vector<2x32xf32>
    tpu.vector_store %arg11[%c0_55, %c0_56], %205 {strides = array<i32>} : memref<2x32xf32, #tpu.memory_space<vmem>>, vector<2x32xf32>,
    %c1_i32_57 = arith.constant 1 : i32
    %211 = arith.cmpi eq, %arg0, %c1_i32_57 : i32
    %212 = arith.extui %211 : i1 to i32
    %c0_i32_58 = arith.constant 0 : i32
    %213 = arith.cmpi ne, %212, %c0_i32_58 : i32
    scf.if %213 {
      %c0_59 = arith.constant 0 : index
      %c0_60 = arith.constant 0 : index
      %214 = vector.load %arg8[%c0_59, %c0_60] : memref<2x32xf32, #tpu.memory_space<vmem>>, vector<2x32xf32>
      tpu.vector_store %arg8[%c0_59, %c0_60], %199 {strides = array<i32>} : memref<2x32xf32, #tpu.memory_space<vmem>>, vector<2x32xf32>,
      %c0_61 = arith.constant 0 : index
      %c0_62 = arith.constant 0 : index
      %215 = vector.load %arg9[%c0_61, %c0_62] : memref<2x32xf32, #tpu.memory_space<vmem>>, vector<2x32xf32>
      tpu.vector_store %arg9[%c0_61, %c0_62], %205 {strides = array<i32>} : memref<2x32xf32, #tpu.memory_space<vmem>>, vector<2x32xf32>,
    } else {
    }
    return
  }
  func.func @transform_0(%arg0: i32) -> (i32, i32, i32) {
    %c0_i32 = arith.constant 0 : i32
    %c0_i32_0 = arith.constant 0 : i32
    %c0_i32_1 = arith.constant 0 : i32
    return %arg0, %c0_i32, %c0_i32_0 : i32, i32, i32
  }
  func.func @transform_1(%arg0: i32) -> (i32, i32) {
    %c0_i32 = arith.constant 0 : i32
    %c0_i32_0 = arith.constant 0 : i32
    %c0_i32_1 = arith.constant 0 : i32
    return %c0_i32, %c0_i32_0 : i32, i32
  }
  func.func @transform_2(%arg0: i32) -> (i32, i32) {
    %c0_i32 = arith.constant 0 : i32
    %c0_i32_0 = arith.constant 0 : i32
    %c0_i32_1 = arith.constant 0 : i32
    return %c0_i32, %c0_i32_0 : i32, i32
  }
  func.func @transform_3(%arg0: i32) -> (i32, i32) {
    %c0_i32 = arith.constant 0 : i32
    %c0_i32_0 = arith.constant 0 : i32
    %c0_i32_1 = arith.constant 0 : i32
    return %c0_i32, %c0_i32_0 : i32, i32
  }
  func.func @transform_4(%arg0: i32) -> (i32, i32) {
    %c0_i32 = arith.constant 0 : i32
    %c0_i32_0 = arith.constant 0 : i32
    %c0_i32_1 = arith.constant 0 : i32
    return %c0_i32, %c0_i32_0 : i32, i32
  }
  func.func @transform_5(%arg0: i32) -> (i32, i32) {
    %c0_i32 = arith.constant 0 : i32
    %c0_i32_0 = arith.constant 0 : i32
    %c0_i32_1 = arith.constant 0 : i32
    return %c0_i32, %c0_i32_0 : i32, i32
  }
  func.func @transform_6(%arg0: i32) -> (i32, i32, i32) {
    %c0_i32 = arith.constant 0 : i32
    %c0_i32_0 = arith.constant 0 : i32
    %c0_i32_1 = arith.constant 0 : i32
    return %arg0, %c0_i32, %c0_i32_0 : i32, i32, i32
  }
  func.func @transform_7(%arg0: i32) -> (i32, i32) {
    %c0_i32 = arith.constant 0 : i32
    %c0_i32_0 = arith.constant 0 : i32
    %c0_i32_1 = arith.constant 0 : i32
    return %c0_i32, %c0_i32_0 : i32, i32
  }
  func.func @transform_8(%arg0: i32) -> (i32, i32) {
    %c0_i32 = arith.constant 0 : i32
    %c0_i32_0 = arith.constant 0 : i32
    %c0_i32_1 = arith.constant 0 : i32
    return %c0_i32, %c0_i32_0 : i32, i32
  }
}

</mosaic_0001>

<llo_original>
// kernel: tpu_custom_call.1
$region0: #{tpu_custom_call.1}
  #allocation0 [shape = 'u32[]', space=smem, size = 0x4, offset = 0x4, fixed_abs, tag = 'smem constant byte address 0x4 - core index']
  #allocation1 [shape = 'u32[144,128]{1,0:T(1,128)}', space=vmem, size = 0x12000, scoped, tag = 'internal scratch']
  #allocation2 [shape = 'f32[2,32]{1,0:T(2,128)}', space=vmem, size = 0x400, scoped, tag = 'scratch operand']
  #allocation3 [shape = 'f32[2,32]{1,0:T(2,128)}', space=vmem, size = 0x400, scoped, tag = 'scratch operand']
  %s0 = inlined_call_operand.hbm [shape: bf16[2,8,32], index: 0, kind: input, shape index: {}]
  %s1 = inlined_call_operand.hbm [shape: bf16[32,128], index: 1, kind: input, shape index: {}]
  %s2 = inlined_call_operand.hbm [shape: bf16[32,128], index: 2, kind: input, shape index: {}]
  %s3 = inlined_call_operand.vmem [shape: f32[1,128], index: 3, kind: input, shape index: {}]
  %s4 = inlined_call_operand.vmem [shape: f32[2,32], index: 4, kind: input, shape index: {}]
  %s5 = inlined_call_operand.vmem [shape: f32[2,32], index: 5, kind: input, shape index: {}]
  %s6 = inlined_call_operand.hbm [shape: f32[2,8,32], index: 6, kind: output, shape index: {0}]
  %s7 = inlined_call_operand.hbm [shape: f32[2,32], index: 7, kind: output, shape index: {1}]
  %s8 = inlined_call_operand.hbm [shape: f32[2,32], index: 8, kind: output, shape index: {2}]
  %9 = xla_tuple %s6, %s7, %s8
  %s10 = sld [smem:[#allocation0]]
  $region93: #{tpu_custom_call.1} parent=0
    _
  %s12 = ssub.s32 1, %s10
  %s13 = scalar_select 0, %s12, %s10
  $region1: #{tpu_custom_call.1} parent=0
    #allocation4 [shape = 'u8[4096]{0}', space=vmem, size = 0x1000, scoped, tag = 'input window, operand 0']
    #allocation5 [shape = 's32[2]{0}', space=sflag, size = 0x8, scoped, tag = 'scoped memory for tpu_custom_call.1']
    #allocation6 [shape = 's32[2]{0}', space=sflag, size = 0x8, scoped, tag = 'scoped memory for tpu_custom_call.1']
    #allocation7 [shape = 'u8[8192]{0}', space=vmem, size = 0x2000, scoped, tag = 'input window, operand 1, single buffered']
    #allocation8 [shape = 's32[1]{0}', space=sflag, size = 0x4, scoped, tag = 'scoped memory for tpu_custom_call.1']
    #allocation9 [shape = 'u8[8192]{0}', space=vmem, size = 0x2000, scoped, tag = 'input window, operand 2, single buffered']
    #allocation10 [shape = 'u8[8192]{0}', space=vmem, size = 0x2000, scoped, tag = 'output window, operand 0']
    #allocation11 [shape = 'u8[1024]{0}', space=vmem, size = 0x400, scoped, tag = 'output window, operand 1, single buffered']
    #allocation12 [shape = 's32[1]{0}', space=sflag, size = 0x4, scoped, tag = 'scoped memory for tpu_custom_call.1']
    #allocation13 [shape = 'u8[1024]{0}', space=vmem, size = 0x400, scoped, tag = 'output window, operand 2, single buffered']
    %14 = vsyncpa [#allocation5], 0
    %s15 = scalar_lea.sflag [#allocation5], 1
    %16 = vsyncpa %s15, 0
    %17 = vsyncpa [#allocation8], 0
    %18 = vsyncpa [#allocation6], 0
    %s19 = scalar_lea.sflag [#allocation6], 1
    %20 = vsyncpa %s19, 0
    %21 = vsyncpa [#allocation12], 0
    loop: start=0, step=1, limit=4
    $region2: #{tpu_custom_call.1} parent=1 // loop_pre_header
      _
    $region3: #{tpu_custom_call.1} parent=1 // loop_header
      %s23 = sphi 0, %s27
      %p24 = scmp.ge.s32.totalorder %s23, 4
      %s33 = sphi 0, %s35
      %s36 = sphi 0, %s33
      %s37 = sphi 0, %s36
      %s53 = sphi 0, %s37
      %s57 = sphi 0, %s57
      %s59 = sphi 0, %s57
      %s60 = sphi 0, %s59
      %s74 = sphi 0, %s60
      %s78 = sphi 0, %s78
      %s80 = sphi 0, %s78
      %s81 = sphi 0, %s80
      %s95 = sphi 0, %s81
      %s99 = sphi 0, %s99
      %s101 = sphi 0, %s99
      %s102 = sphi 0, %s101
      %s116 = sphi 0, %s102
      %s120 = sphi 0, %s120
      %s122 = sphi 0, %s120
      %s123 = sphi 0, %s122
      %s137 = sphi 0, %s123
      %s141 = sphi 0, %s141
      %s143 = sphi 0, %s141
      %s144 = sphi 0, %s143
      %s158 = sphi 0, %s144
      %s164 = sphi 0, %s166
      %s167 = sphi 0, %s164
      %s168 = sphi 0, %s167
      %s184 = sphi 0, %s168
      %s188 = sphi 0, %s188
      %s190 = sphi 0, %s188
      %s191 = sphi 0, %s190
      %s205 = sphi 0, %s191
      %s209 = sphi 0, %s209
      %s211 = sphi 0, %s209
      %s212 = sphi 0, %s211
      %s226 = sphi 0, %s212
    $region4: #{tpu_custom_call.1} parent=1 // loop_header_branch
      %26 = sbr.rel (%p24) target = $region8
    $region5: #{tpu_custom_call.1} parent=1 // loop_body
      %s28 = ssub.s32 %s23, 1
      %s29 = ssub.s32 %s23, 2
      %s30 = sadd.s32 %s23, 1
      %s31 = ssub.s32 %s23, %s30
      %p32 = scmp.eq.s32.totalorder %s31, 0
      %s34 = sadd.s32 %s33, 1
      %s35 = scalar_select %p32, %s33, %s34
      %p38 = pneg %p32
      %p39 = scmp.eq.s32.totalorder %s23, 1
      %p40 = por %p38, %p39
      %p41 = scmp.ne.s32.totalorder %s33, %s36
      %p42 = scmp.eq.s32.totalorder %s23, 0
      %p43 = por %p41, %p42
      %p44 = scmp.ne.s32.totalorder %s33, %s36
      %p45 = scmp.eq.s32.totalorder %s28, 1
      %p46 = por %p44, %p45
      %p47 = scmp.ne.s32.totalorder %s36, %s37
      %p48 = scmp.eq.s32.totalorder %s28, 0
      %p49 = por %p47, %p48
      %p50 = scmp.ne.s32.totalorder %s36, %s37
      %p51 = scmp.eq.s32.totalorder %s29, 1
      %p52 = por %p50, %p51
      %p54 = scmp.ne.s32.totalorder %s37, %s53
      %p55 = scmp.eq.s32.totalorder %s29, 0
      %p56 = por %p54, %p55
      %s58 = sadd.s32 %s57, 1
      %p61 = scmp.eq.s32.totalorder %s23, 1
      %p62 = scmp.ne.s32.totalorder %s57, %s59
      %p63 = scmp.eq.s32.totalorder %s23, 0
      %p64 = por %p62, %p63
      %p65 = scmp.ne.s32.totalorder %s57, %s59
      %p66 = scmp.eq.s32.totalorder %s28, 1
      %p67 = por %p65, %p66
      %p68 = scmp.ne.s32.totalorder %s59, %s60
      %p69 = scmp.eq.s32.totalorder %s28, 0
      %p70 = por %p68, %p69
      %p71 = scmp.ne.s32.totalorder %s59, %s60
      %p72 = scmp.eq.s32.totalorder %s29, 1
      %p73 = por %p71, %p72
      %p75 = scmp.ne.s32.totalorder %s60, %s74
      %p76 = scmp.eq.s32.totalorder %s29, 0
      %p77 = por %p75, %p76
      %s79 = sadd.s32 %s78, 1
      %p82 = scmp.eq.s32.totalorder %s23, 1
      %p83 = scmp.ne.s32.totalorder %s78, %s80
      %p84 = scmp.eq.s32.totalorder %s23, 0
      %p85 = por %p83, %p84
      %p86 = scmp.ne.s32.totalorder %s78, %s80
      %p87 = scmp.eq.s32.totalorder %s28, 1
      %p88 = por %p86, %p87
      %p89 = scmp.ne.s32.totalorder %s80, %s81
      %p90 = scmp.eq.s32.totalorder %s28, 0
      %p91 = por %p89, %p90
      %p92 = scmp.ne.s32.totalorder %s80, %s81
      %p93 = scmp.eq.s32.totalorder %s29, 1
      %p94 = por %p92, %p93
      %p96 = scmp.ne.s32.totalorder %s81, %s95
      %p97 = scmp.eq.s32.totalorder %s29, 0
      %p98 = por %p96, %p97
      %s100 = sadd.s32 %s99, 1
      %p103 = scmp.eq.s32.totalorder %s23, 1
      %p104 = scmp.ne.s32.totalorder %s99, %s101
      %p105 = scmp.eq.s32.totalorder %s23, 0
      %p106 = por %p104, %p105
      %p107 = scmp.ne.s32.totalorder %s99, %s101
      %p108 = scmp.eq.s32.totalorder %s28, 1
      %p109 = por %p107, %p108
      %p110 = scmp.ne.s32.totalorder %s101, %s102
      %p111 = scmp.eq.s32.totalorder %s28, 0
      %p112 = por %p110, %p111
      %p113 = scmp.ne.s32.totalorder %s101, %s102
      %p114 = scmp.eq.s32.totalorder %s29, 1
      %p115 = por %p113, %p114
      %p117 = scmp.ne.s32.totalorder %s102, %s116
      %p118 = scmp.eq.s32.totalorder %s29, 0
      %p119 = por %p117, %p118
      %s121 = sadd.s32 %s120, 1
      %p124 = scmp.eq.s32.totalorder %s23, 1
      %p125 = scmp.ne.s32.totalorder %s120, %s122
      %p126 = scmp.eq.s32.totalorder %s23, 0
      %p127 = por %p125, %p126
      %p128 = scmp.ne.s32.totalorder %s120, %s122
      %p129 = scmp.eq.s32.totalorder %s28, 1
      %p130 = por %p128, %p129
      %p131 = scmp.ne.s32.totalorder %s122, %s123
      %p132 = scmp.eq.s32.totalorder %s28, 0
      %p133 = por %p131, %p132
      %p134 = scmp.ne.s32.totalorder %s122, %s123
      %p135 = scmp.eq.s32.totalorder %s29, 1
      %p136 = por %p134, %p135
      %p138 = scmp.ne.s32.totalorder %s123, %s137
      %p139 = scmp.eq.s32.totalorder %s29, 0
      %p140 = por %p138, %p139
      %s142 = sadd.s32 %s141, 1
      %p145 = scmp.eq.s32.totalorder %s23, 1
      %p146 = scmp.ne.s32.totalorder %s141, %s143
      %p147 = scmp.eq.s32.totalorder %s23, 0
      %p148 = por %p146, %p147
      %p149 = scmp.ne.s32.totalorder %s141, %s143
      %p150 = scmp.eq.s32.totalorder %s28, 1
      %p151 = por %p149, %p150
      %p152 = scmp.ne.s32.totalorder %s143, %s144
      %p153 = scmp.eq.s32.totalorder %s28, 0
      %p154 = por %p152, %p153
      %p155 = scmp.ne.s32.totalorder %s143, %s144
      %p156 = scmp.eq.s32.totalorder %s29, 1
      %p157 = por %p155, %p156
      %p159 = scmp.ne.s32.totalorder %s144, %s158
      %p160 = scmp.eq.s32.totalorder %s29, 0
      %p161 = por %p159, %p160
      %s162 = ssub.s32 %s23, %s30
      %p163 = scmp.eq.s32.totalorder %s162, 0
      %s165 = sadd.s32 %s164, 1
      %s166 = scalar_select %p163, %s164, %s165
      %p169 = pneg %p163
      %p170 = scmp.eq.s32.totalorder %s23, 1
      %p171 = por %p169, %p170
      %p172 = scmp.ne.s32.totalorder %s164, %s167
      %p173 = scmp.eq.s32.totalorder %s23, 0
      %p174 = por %p172, %p173
      %p175 = scmp.ne.s32.totalorder %s164, %s167
      %p176 = scmp.eq.s32.totalorder %s28, 1
      %p177 = por %p175, %p176
      %p178 = scmp.ne.s32.totalorder %s167, %s168
      %p179 = scmp.eq.s32.totalorder %s28, 0
      %p180 = por %p178, %p179
      %p181 = scmp.ne.s32.totalorder %s167, %s168
      %p182 = scmp.eq.s32.totalorder %s29, 1
      %p183 = por %p181, %p182
      %p185 = scmp.ne.s32.totalorder %s168, %s184
      %p186 = scmp.eq.s32.totalorder %s29, 0
      %p187 = por %p185, %p186
      %s189 = sadd.s32 %s188, 1
      %p192 = scmp.eq.s32.totalorder %s23, 1
      %p193 = scmp.ne.s32.totalorder %s188, %s190
      %p194 = scmp.eq.s32.totalorder %s23, 0
      %p195 = por %p193, %p194
      %p196 = scmp.ne.s32.totalorder %s188, %s190
      %p197 = scmp.eq.s32.totalorder %s28, 1
      %p198 = por %p196, %p197
      %p199 = scmp.ne.s32.totalorder %s190, %s191
      %p200 = scmp.eq.s32.totalorder %s28, 0
      %p201 = por %p199, %p200
      %p202 = scmp.ne.s32.totalorder %s190, %s191
      %p203 = scmp.eq.s32.totalorder %s29, 1
      %p204 = por %p202, %p203
      %p206 = scmp.ne.s32.totalorder %s191, %s205
      %p207 = scmp.eq.s32.totalorder %s29, 0
      %p208 = por %p206, %p207
      %s210 = sadd.s32 %s209, 1
      %p213 = scmp.eq.s32.totalorder %s23, 1
      %p214 = scmp.ne.s32.totalorder %s209, %s211
      %p215 = scmp.eq.s32.totalorder %s23, 0
      %p216 = por %p214, %p215
      %p217 = scmp.ne.s32.totalorder %s209, %s211
      %p218 = scmp.eq.s32.totalorder %s28, 1
      %p219 = por %p217, %p218
      %p220 = scmp.ne.s32.totalorder %s211, %s212
      %p221 = scmp.eq.s32.totalorder %s28, 0
      %p222 = por %p220, %p221
      %p223 = scmp.ne.s32.totalorder %s211, %s212
      %p224 = scmp.eq.s32.totalorder %s29, 1
      %p225 = por %p223, %p224
      %p227 = scmp.ne.s32.totalorder %s212, %s226
      %p228 = scmp.eq.s32.totalorder %s29, 0
      %p229 = por %p227, %p228
      %p230 = scmp.le.s32.totalorder 1, %s23
      %p231 = scmp.lt.s32.totalorder %s23, 3
      %p232 = pnand %p230, %p231
      %p233 = pneg %p232
      // Predicated region
      $region9: #{tpu_custom_call.1} parent=5 // pred_check
        _
      $region10: #{tpu_custom_call.1} parent=5 // pred_check_branch
        %235 = sbr.rel (%p232) target = $region12
      $region11: #{tpu_custom_call.1} parent=5 // pred_region
        %s236 = ssub.s32 %s23, 1
        // Predicated region
        $region13: #{tpu_custom_call.1} parent=11 // pred_check
          %p237 = pneg %p70
        $region14: #{tpu_custom_call.1} parent=11 // pred_check_branch
          %239 = sbr.rel (%p237) target = $region16
        $region15: #{tpu_custom_call.1} parent=11 // pred_region
          %s241 = ssub.s32 256, 256
          %242 = vsyncadd [#allocation8], %s241
          %s243 = sshll.u32 [#allocation7], 4
          %s244 = int_to_ptr.vmem [resolvable:$true] %s243
          %249 = dma.hbm_to_vmem [thread:$0]  %s1, 256, %s244, [#allocation8], 64, 64, 4
        $region16: #{tpu_custom_call.1} parent=11 // pred_fallthru
          _
        // Predicated region
        $region17: #{tpu_custom_call.1} parent=11 // pred_check
          %p250 = pneg %p91
        $region18: #{tpu_custom_call.1} parent=11 // pred_check_branch
          %252 = sbr.rel (%p250) target = $region20
        $region19: #{tpu_custom_call.1} parent=11 // pred_region
          %s254 = ssub.s32 256, 256
          %255 = vsyncadd [#allocation8], %s254
          %s256 = sshll.u32 [#allocation9], 4
          %s257 = int_to_ptr.vmem [resolvable:$true] %s256
          %262 = dma.hbm_to_vmem [thread:$0]  %s2, 256, %s257, [#allocation8], 64, 64, 4
        $region20: #{tpu_custom_call.1} parent=11 // pred_fallthru
          _
        // Predicated region
        $region21: #{tpu_custom_call.1} parent=11 // pred_check
          %p263 = pneg %p112
        $region22: #{tpu_custom_call.1} parent=11 // pred_check_branch
          %265 = sbr.rel (%p263) target = $region24
        $region23: #{tpu_custom_call.1} parent=11 // pred_region
          _
        $region24: #{tpu_custom_call.1} parent=11 // pred_fallthru
          _
        // Predicated region
        $region25: #{tpu_custom_call.1} parent=11 // pred_check
          %p266 = pneg %p133
        $region26: #{tpu_custom_call.1} parent=11 // pred_check_branch
          %268 = sbr.rel (%p266) target = $region28
        $region27: #{tpu_custom_call.1} parent=11 // pred_region
          _
        $region28: #{tpu_custom_call.1} parent=11 // pred_fallthru
          _
        // Predicated region
        $region29: #{tpu_custom_call.1} parent=11 // pred_check
          %p269 = pneg %p154
        $region30: #{tpu_custom_call.1} parent=11 // pred_check_branch
          %271 = sbr.rel (%p269) target = $region32
        $region31: #{tpu_custom_call.1} parent=11 // pred_region
          _
        $region32: #{tpu_custom_call.1} parent=11 // pred_fallthru
          _
      $region12: #{tpu_custom_call.1} parent=5 // pred_fallthru
        _
      %p272 = scmp.lt.s32.totalorder %s23, 2
      // Predicated region
      $region33: #{tpu_custom_call.1} parent=5 // pred_check
        %p273 = pneg %p272
      $region34: #{tpu_custom_call.1} parent=5 // pred_check_branch
        %275 = sbr.rel (%p273) target = $region36
      $region35: #{tpu_custom_call.1} parent=5 // pred_region
        // Predicated region
        $region37: #{tpu_custom_call.1} parent=35 // pred_check
          %p276 = pneg %p43
        $region38: #{tpu_custom_call.1} parent=35 // pred_check_branch
          %278 = sbr.rel (%p276) target = $region40
        $region39: #{tpu_custom_call.1} parent=35 // pred_region
          %s279 = sand.u32 %s33, 1
          %s280 = scalar_lea.sflag [#allocation5], %s279
          %s281 = sand.u32 %s33, 1
          %s282 = smul.addr %s281, 4
          %s283 = scalar_lea.vmem [#allocation4], %s282
          %s285 = ssub.s32 64, 64
          %286 = vsyncadd %s280, %s285
          %s287 = smul.addr %s23, 64
          %s288 = scalar_lea.hbm %s0, %s287
          %s290 = sshll.u32 %s283, 4
          %s291 = int_to_ptr.vmem [resolvable:$true] %s290
          %293 = dma.hbm_to_vmem [thread:$0]  %s288, 64, %s291, %s280
        $region40: #{tpu_custom_call.1} parent=35 // pred_fallthru
          _
      $region36: #{tpu_custom_call.1} parent=5 // pred_fallthru
        _
      %p294 = scmp.le.s32.totalorder 1, %s23
      %p295 = scmp.lt.s32.totalorder %s23, 3
      %p296 = pnand %p294, %p295
      %p297 = pneg %p296
      // Predicated region
      $region41: #{tpu_custom_call.1} parent=5 // pred_check
        _
      $region42: #{tpu_custom_call.1} parent=5 // pred_check_branch
        %299 = sbr.rel (%p296) target = $region44
      $region43: #{tpu_custom_call.1} parent=5 // pred_region
        %s300 = ssub.s32 %s23, 1
        %s301 = sand.u32 %s36, 1
        %s302 = scalar_lea.sflag [#allocation5], %s301
        %s303 = sand.u32 %s36, 1
        %s304 = smul.addr %s303, 4
        %s305 = scalar_lea.vmem [#allocation4], %s304
        // Predicated region
        $region45: #{tpu_custom_call.1} parent=43 // pred_check
          %p306 = pneg %p49
        $region46: #{tpu_custom_call.1} parent=43 // pred_check_branch
          %308 = sbr.rel (%p306) target = $region48
        $region47: #{tpu_custom_call.1} parent=43 // pred_region
          %309 = dma.done %s302, 64
        $region48: #{tpu_custom_call.1} parent=43 // pred_fallthru
          _
        // Predicated region
        $region49: #{tpu_custom_call.1} parent=43 // pred_check
          %p310 = pneg %p70
        $region50: #{tpu_custom_call.1} parent=43 // pred_check_branch
          %312 = sbr.rel (%p310) target = $region52
        $region51: #{tpu_custom_call.1} parent=43 // pred_region
          %313 = dma.done [#allocation8], 256
        $region52: #{tpu_custom_call.1} parent=43 // pred_fallthru
          _
        // Predicated region
        $region53: #{tpu_custom_call.1} parent=43 // pred_check
          %p314 = pneg %p91
        $region54: #{tpu_custom_call.1} parent=43 // pred_check_branch
          %316 = sbr.rel (%p314) target = $region56
        $region55: #{tpu_custom_call.1} parent=43 // pred_region
          %317 = dma.done [#allocation8], 256
        $region56: #{tpu_custom_call.1} parent=43 // pred_fallthru
          _
        %s318 = sand.u32 %s36, 1
        %s319 = scalar_lea.sflag [#allocation5], %s318
        %s320 = sand.u32 %s36, 1
        %s321 = smul.addr %s320, 4
        %s322 = scalar_lea.vmem [#allocation4], %s321
        %p323 = pneg %p49
        %p324 = pneg %p46
        %p325 = pneg %p70
        %p326 = pneg %p67
        %p327 = pneg %p91
        %p328 = pneg %p88
        %p329 = pneg %p112
        %p330 = pneg %p109
        %p331 = pneg %p133
        %p332 = pneg %p130
        %p333 = pneg %p154
        %p334 = pneg %p151
        %p335 = pneg %p180
        %p336 = pneg %p177
        %s337 = sand.u32 %s167, 1
        %s338 = scalar_lea.sflag [#allocation6], %s337
        %s339 = sand.u32 %s167, 1
        %s340 = smul.addr %s339, 8
        %s341 = scalar_lea.vmem [#allocation10], %s340
        %p342 = pneg %p201
        %p343 = pneg %p198
        %p344 = pneg %p222
        %p345 = pneg %p219
        %p347 = scmp.eq.s32.totalorder %s28, 0
        // Predicated region
        $region57: #{tpu_custom_call.1} parent=43 // pred_check
          %p348 = pneg %p347
        $region58: #{tpu_custom_call.1} parent=43 // pred_check_branch
          %350 = sbr.rel (%p348) target = $region60
        $region59: #{tpu_custom_call.1} parent=43 // pred_region
          %v351 = vld [vmem:[%s4] sm:$0x3]
          %vm352 = vcmask 254976
          %353 = vst.msk [vmem:[#allocation2] sm:$0x3] %vm352, %v351
          %v354 = vld [vmem:[%s5] sm:$0x3]
          %355 = vst.msk [vmem:[#allocation3] sm:$0x3] %vm352, %v354
        $region60: #{tpu_custom_call.1} parent=43 // pred_fallthru
          _
        %v356 = vld [vmem:[%s305] sm:$0xf]
        %v357 = vld [vmem:[#allocation7] sm:$0xf]
        %v358 = vld [vmem:[#allocation7 + $0x4] sm:$0xf]
        %v359 = vld [vmem:[#allocation7 + $0x8] sm:$0xf]
        %v360 = vld [vmem:[#allocation7 + $0xc] sm:$0xf]
        %v361 = vld [vmem:[%s3] sm:$0x1]
        %v363 = vlaneseq
        %v364 = vshrl.u32 %v363, 7
        %v365 = vsub.s32 0, %v364
        %v366 = vrot.slane %v361, %v365
        %v372 = vunpack.c.l.b16 %v357
        %v373 = vunpack.c.l.b16 %v358
        %v374 = vunpack.c.l.b16 %v359
        %v375 = vunpack.c.l.b16 %v360
        %v376 = vpack.c.b16 %v373, %v372
        %v377 = vpack.c.b16 %v375, %v374
        %vm380 = vcmask 261120
        %v382 = vsel %vm380, %v356, 0
        %384 = vmatprep.subr.bf16.mxu0 0
        %385 = vmatpush1.bf16.msra.mxu0 %v376
        %386 = vmatprep.subr.bf16.mxu0 0
        %387 = vmatpush1.bf16.msra.mxu0 %v377
        %388 = vmatprep.subr.bf16.mxu0 0
        %389 = vmatpush1.bf16.msra.mxu0 0
        %390 = vmatprep.subr.bf16.mxu0 0
        %391 = vmatpush1.bf16.msra.mxu0 0
        %392 = vmatprep.subr.bf16.mxu0 0
        %393 = vmatpush1.bf16.msra.mxu0 0
        %394 = vmatprep.subr.bf16.mxu0 0
        %395 = vmatpush1.bf16.msra.mxu0 0
        %396 = vmatprep.subr.bf16.mxu0 0
        %397 = vmatpush1.bf16.msra.mxu0 0
        %398 = vmatprep.subr.bf16.mxu0 0
        %399 = vmatpush1.bf16.msra.mxu0 0
        %400 = vmatprep.subr.bf16.mxu0 0
        %401 = vmatpush1.bf16.msra.mxu0 0
        %402 = vmatprep.subr.bf16.mxu0 0
        %403 = vmatpush1.bf16.msra.mxu0 0
        %404 = vmatprep.subr.bf16.mxu0 0
        %405 = vmatpush1.bf16.msra.mxu0 0
        %406 = vmatprep.subr.bf16.mxu0 0
        %407 = vmatpush1.bf16.msra.mxu0 0
        %408 = vmatprep.subr.bf16.mxu0 0
        %409 = vmatpush1.bf16.msra.mxu0 0
        %410 = vmatprep.subr.bf16.mxu0 0
        %411 = vmatpush1.bf16.msra.mxu0 0
        %412 = vmatprep.subr.bf16.mxu0 0
        %413 = vmatpush1.bf16.msra.mxu0 0
        %414 = vmatprep.subr.bf16.mxu0 0
        %415 = vmatpush1.bf16.msra.mxu0 0
        %416 = vmatprep.mubr.bf16.mxu0 0
        %417 = vmatmul.mubr.bf16.gmra.mrb[0].mxu0 %v382
        %v418 = vpop.f32.mrb[0].mxu0
        %v419 = vadd.f32 %v366, %v418
        %v420 = vpop.f32.mrb[0].mxu0
        %v421 = vpop.f32.mrb[0].mxu0
        %v422 = vpop.f32.mrb[0].mxu0
        %423 = vdwg.mxu0
        %v424 = vld [vmem:[#allocation2] sm:$0x3]
        %v425 = vld [vmem:[#allocation3] sm:$0x3]
        %v426 = vld [vmem:[#allocation9] sm:$0xf]
        %v427 = vld [vmem:[#allocation9 + $0x4] sm:$0xf]
        %v428 = vld [vmem:[#allocation9 + $0x8] sm:$0xf]
        %v429 = vld [vmem:[#allocation9 + $0xc] sm:$0xf]
        %v430 = vpack.c.bf16 %v424, %v424
        %v435 = vunpack.c.l.b16 %v426
        %v436 = vunpack.c.l.b16 %v427
        %v437 = vunpack.c.l.b16 %v428
        %v438 = vunpack.c.l.b16 %v429
        %v439 = vpack.c.b16 %v436, %v435
        %v440 = vpack.c.b16 %v438, %v437
        %v444 = vsel %vm380, %v430, 0
        %446 = vmatprep.subr.bf16.mxu0 0
        %447 = vmatpush1.bf16.msra.mxu0 %v439
        %448 = vmatprep.subr.bf16.mxu0 0
        %449 = vmatpush1.bf16.msra.mxu0 %v440
        %450 = vmatprep.subr.bf16.mxu0 0
        %451 = vmatpush1.bf16.msra.mxu0 0
        %452 = vmatprep.subr.bf16.mxu0 0
        %453 = vmatpush1.bf16.msra.mxu0 0
        %454 = vmatprep.subr.bf16.mxu0 0
        %455 = vmatpush1.bf16.msra.mxu0 0
        %456 = vmatprep.subr.bf16.mxu0 0
        %457 = vmatpush1.bf16.msra.mxu0 0
        %458 = vmatprep.subr.bf16.mxu0 0
        %459 = vmatpush1.bf16.msra.mxu0 0
        %460 = vmatprep.subr.bf16.mxu0 0
        %461 = vmatpush1.bf16.msra.mxu0 0
        %462 = vmatprep.subr.bf16.mxu0 0
        %463 = vmatpush1.bf16.msra.mxu0 0
        %464 = vmatprep.subr.bf16.mxu0 0
        %465 = vmatpush1.bf16.msra.mxu0 0
        %466 = vmatprep.subr.bf16.mxu0 0
        %467 = vmatpush1.bf16.msra.mxu0 0
        %468 = vmatprep.subr.bf16.mxu0 0
        %469 = vmatpush1.bf16.msra.mxu0 0
        %470 = vmatprep.subr.bf16.mxu0 0
        %471 = vmatpush1.bf16.msra.mxu0 0
        %472 = vmatprep.subr.bf16.mxu0 0
        %473 = vmatpush1.bf16.msra.mxu0 0
        %474 = vmatprep.subr.bf16.mxu0 0
        %475 = vmatpush1.bf16.msra.mxu0 0
        %476 = vmatprep.subr.bf16.mxu0 0
        %477 = vmatpush1.bf16.msra.mxu0 0
        %478 = vmatprep.mubr.bf16.mxu0 0
        %479 = vmatmul.mubr.bf16.gmra.mrb[0].mxu0 %v444
        %v480 = vpop.f32.mrb[0].mxu0
        %v481 = vadd.f32 0.0, %v480
        %v482 = vpop.f32.mrb[0].mxu0
        %v483 = vpop.f32.mrb[0].mxu0
        %v484 = vpop.f32.mrb[0].mxu0
        %485 = vdwg.mxu0
        %v486 = vadd.f32 %v419, %v481
        %v487 = vxor.u32 %v486, 2147483648
        %v488 = vmul.f32 %v487, 1.442695
        %v489 = vpow.pop %v488
        %v490 = vadd.f32 %v489, 1.0
        %v491 = vrcp.pop %v490
        %v492 = vmul.f32 1.0, %v491
        %v493 = vtanh.pop %v486
        %495 = vrot.lane.b32.xlu0 %v425, 32
        %v496 = vpop.permute.xlu0 %495
        %v498 = vmul.f32 %v492, %v496
        %500 = vrot.lane.b32.xlu0 %v493, 64
        %v501 = vpop.permute.xlu0 %500
        %v503 = vmul.f32 %v492, %v501
        %505 = vrot.lane.b32.xlu0 %v503, 32
        %v506 = vpop.permute.xlu0 %505
        %v508 = vadd.f32 %v498, %v506
        %v509 = vtanh.pop %v508
        %511 = vrot.lane.b32.xlu0 %v509, 64
        %v512 = vpop.permute.xlu0 %511
        %v514 = vmul.f32 %v492, %v512
        %s515 = smul.u32 %s28, 4
        %p516 = scmp.lt.s32.totalorder %s515, 7
        %s517 = scalar_select %p516, 1, 0
        %s518 = scvt.s32.f32 %s517
        %v519 = vstv %s518
        %v520 = vmul.f32 %v519, %v514
        %s521 = ssub.f32 1.0, %s518
        %v522 = vstv %s521
        %v523 = vmul.f32 %v522, %v424
        %525 = vrot.lane.b32.xlu0 %v523, 96
        %v526 = vpop.permute.xlu0 %525
        %v528 = vadd.f32 %v520, %v526
        %v529 = vmul.f32 %v519, %v508
        %v530 = vmul.f32 %v522, %v425
        %532 = vrot.lane.b32.xlu0 %v530, 32
        %v533 = vpop.permute.xlu0 %532
        %v535 = vadd.f32 %v529, %v533
        %537 = vrot.lane.b32.xlu0 %v514, 32
        %v538 = vpop.permute.xlu0 %537
        %vm540 = vcmask 254976
        %541 = vst.msk [vmem:[%s341] sm:$0x3] %vm540, %v538
        %v542 = vpack.c.bf16 %v528, %v528
        %544 = vrot.lane.b32.xlu0 %v542, 32
        %v545 = vpop.permute.xlu0 %544
        %v547 = vsel %vm380, %v545, 0
        %549 = vmatprep.subr.bf16.mxu0 0
        %550 = vmatpush1.bf16.msra.mxu0 %v439
        %551 = vmatprep.subr.bf16.mxu0 0
        %552 = vmatpush1.bf16.msra.mxu0 %v440
        %553 = vmatprep.subr.bf16.mxu0 0
        %554 = vmatpush1.bf16.msra.mxu0 0
        %555 = vmatprep.subr.bf16.mxu0 0
        %556 = vmatpush1.bf16.msra.mxu0 0
        %557 = vmatprep.subr.bf16.mxu0 0
        %558 = vmatpush1.bf16.msra.mxu0 0
        %559 = vmatprep.subr.bf16.mxu0 0
        %560 = vmatpush1.bf16.msra.mxu0 0
        %561 = vmatprep.subr.bf16.mxu0 0
        %562 = vmatpush1.bf16.msra.mxu0 0
        %563 = vmatprep.subr.bf16.mxu0 0
        %564 = vmatpush1.bf16.msra.mxu0 0
        %565 = vmatprep.subr.bf16.mxu0 0
        %566 = vmatpush1.bf16.msra.mxu0 0
        %567 = vmatprep.subr.bf16.mxu0 0
        %568 = vmatpush1.bf16.msra.mxu0 0
        %569 = vmatprep.subr.bf16.mxu0 0
        %570 = vmatpush1.bf16.msra.mxu0 0
        %571 = vmatprep.subr.bf16.mxu0 0
        %572 = vmatpush1.bf16.msra.mxu0 0
        %573 = vmatprep.subr.bf16.mxu0 0
        %574 = vmatpush1.bf16.msra.mxu0 0
        %575 = vmatprep.subr.bf16.mxu0 0
        %576 = vmatpush1.bf16.msra.mxu0 0
        %577 = vmatprep.subr.bf16.mxu0 0
        %578 = vmatpush1.bf16.msra.mxu0 0
        %579 = vmatprep.subr.bf16.mxu0 0
        %580 = vmatpush1.bf16.msra.mxu0 0
        %581 = vmatprep.mubr.bf16.mxu0 0
        %582 = vmatmul.mubr.bf16.gmra.mrb[0].mxu0 %v547
        %v583 = vpop.f32.mrb[0].mxu0
        %v584 = vadd.f32 0.0, %v583
        %v585 = vpop.f32.mrb[0].mxu0
        %v586 = vpop.f32.mrb[0].mxu0
        %v587 = vpop.f32.mrb[0].mxu0
        %588 = vdwg.mxu0
        %v590 = vrot.slane %v584, 6
        %v592 = vadd.f32 %v419, %v590
        %v593 = vxor.u32 %v592, 2147483648
        %v594 = vmul.f32 %v593, 1.442695
        %v595 = vpow.pop %v594
        %v596 = vadd.f32 %v595, 1.0
        %v597 = vrcp.pop %v596
        %v598 = vmul.f32 1.0, %v597
        %v599 = vtanh.pop %v592
        %v601 = vrot.slane %v535, 6
        %v603 = vmul.f32 %v598, %v601
        %605 = vrot.lane.b32.xlu0 %v599, 64
        %v606 = vpop.permute.xlu0 %605
        %v608 = vmul.f32 %v598, %v606
        %610 = vrot.lane.b32.xlu0 %v608, 32
        %v611 = vpop.permute.xlu0 %610
        %v613 = vadd.f32 %v603, %v611
        %v614 = vtanh.pop %v613
        %616 = vrot.lane.b32.xlu0 %v614, 64
        %v617 = vpop.permute.xlu0 %616
        %v619 = vmul.f32 %v598, %v617
        %s620 = sadd.s32 %s515, 1
        %p621 = scmp.lt.s32.totalorder %s620, 7
        %s622 = scalar_select %p621, 1, 0
        %s623 = scvt.s32.f32 %s622
        %v624 = vstv %s623
        %v625 = vmul.f32 %v624, %v619
        %s626 = ssub.f32 1.0, %s623
        %v627 = vstv %s626
        %v628 = vmul.f32 %v627, %v528
        %v630 = vrot.slane %v628, 6
        %v632 = vadd.f32 %v625, %v630
        %v633 = vmul.f32 %v624, %v613
        %v634 = vmul.f32 %v627, %v535
        %v636 = vrot.slane %v634, 6
        %v638 = vadd.f32 %v633, %v636
        %640 = vrot.lane.b32.xlu0 %v619, 32
        %v641 = vpop.permute.xlu0 %640
        %vm643 = vcmask 257026
        %644 = vst.msk [vmem:[%s341] sm:$0xc] %vm643, %v641
        %v645 = vpack.c.bf16 %v632, %v632
        %v647 = vrot.slane %v645, 1
        %648 = vrot.lane.b32.xlu0 %v647, 32
        %v649 = vpop.permute.xlu0 %648
        %v651 = vsel %vm380, %v649, 0
        %653 = vmatprep.subr.bf16.mxu0 0
        %654 = vmatpush1.bf16.msra.mxu0 %v439
        %655 = vmatprep.subr.bf16.mxu0 0
        %656 = vmatpush1.bf16.msra.mxu0 %v440
        %657 = vmatprep.subr.bf16.mxu0 0
        %658 = vmatpush1.bf16.msra.mxu0 0
        %659 = vmatprep.subr.bf16.mxu0 0
        %660 = vmatpush1.bf16.msra.mxu0 0
        %661 = vmatprep.subr.bf16.mxu0 0
        %662 = vmatpush1.bf16.msra.mxu0 0
        %663 = vmatprep.subr.bf16.mxu0 0
        %664 = vmatpush1.bf16.msra.mxu0 0
        %665 = vmatprep.subr.bf16.mxu0 0
        %666 = vmatpush1.bf16.msra.mxu0 0
        %667 = vmatprep.subr.bf16.mxu0 0
        %668 = vmatpush1.bf16.msra.mxu0 0
        %669 = vmatprep.subr.bf16.mxu0 0
        %670 = vmatpush1.bf16.msra.mxu0 0
        %671 = vmatprep.subr.bf16.mxu0 0
        %672 = vmatpush1.bf16.msra.mxu0 0
        %673 = vmatprep.subr.bf16.mxu0 0
        %674 = vmatpush1.bf16.msra.mxu0 0
        %675 = vmatprep.subr.bf16.mxu0 0
        %676 = vmatpush1.bf16.msra.mxu0 0
        %677 = vmatprep.subr.bf16.mxu0 0
        %678 = vmatpush1.bf16.msra.mxu0 0
        %679 = vmatprep.subr.bf16.mxu0 0
        %680 = vmatpush1.bf16.msra.mxu0 0
        %681 = vmatprep.subr.bf16.mxu0 0
        %682 = vmatpush1.bf16.msra.mxu0 0
        %683 = vmatprep.subr.bf16.mxu0 0
        %684 = vmatpush1.bf16.msra.mxu0 0
        %685 = vmatprep.mubr.bf16.mxu0 0
        %686 = vmatmul.mubr.bf16.gmra.mrb[0].mxu0 %v651
        %v687 = vpop.f32.mrb[0].mxu0
        %v688 = vadd.f32 0.0, %v687
        %v689 = vpop.f32.mrb[0].mxu0
        %v690 = vpop.f32.mrb[0].mxu0
        %v691 = vpop.f32.mrb[0].mxu0
        %692 = vdwg.mxu0
        %v694 = vrot.slane %v688, 4
        %v696 = vadd.f32 %v419, %v694
        %v697 = vxor.u32 %v696, 2147483648
        %v698 = vmul.f32 %v697, 1.442695
        %v699 = vpow.pop %v698
        %v700 = vadd.f32 %v699, 1.0
        %v701 = vrcp.pop %v700
        %v702 = vmul.f32 1.0, %v701
        %v703 = vtanh.pop %v696
        %v705 = vrot.slane %v638, 6
        %v707 = vmul.f32 %v702, %v705
        %709 = vrot.lane.b32.xlu0 %v703, 64
        %v710 = vpop.permute.xlu0 %709
        %v712 = vmul.f32 %v702, %v710
        %714 = vrot.lane.b32.xlu0 %v712, 32
        %v715 = vpop.permute.xlu0 %714
        %v717 = vadd.f32 %v707, %v715
        %v718 = vtanh.pop %v717
        %720 = vrot.lane.b32.xlu0 %v718, 64
        %v721 = vpop.permute.xlu0 %720
        %v723 = vmul.f32 %v702, %v721
        %s724 = sadd.s32 %s515, 2
        %p725 = scmp.lt.s32.totalorder %s724, 7
        %s726 = scalar_select %p725, 1, 0
        %s727 = scvt.s32.f32 %s726
        %v728 = vstv %s727
        %v729 = vmul.f32 %v728, %v723
        %s730 = ssub.f32 1.0, %s727
        %v731 = vstv %s730
        %v732 = vmul.f32 %v731, %v632
        %v734 = vrot.slane %v732, 6
        %v736 = vadd.f32 %v729, %v734
        %v737 = vmul.f32 %v728, %v717
        %v738 = vmul.f32 %v731, %v638
        %v740 = vrot.slane %v738, 6
        %v742 = vadd.f32 %v737, %v740
        %744 = vrot.lane.b32.xlu0 %v723, 32
        %v745 = vpop.permute.xlu0 %744
        %vm747 = vcmask 259076
        %748 = vst.msk [vmem:[%s341] sm:$0x30] %vm747, %v745
        %v749 = vpack.c.bf16 %v736, %v736
        %v751 = vrot.slane %v749, 2
        %752 = vrot.lane.b32.xlu0 %v751, 32
        %v753 = vpop.permute.xlu0 %752
        %v755 = vsel %vm380, %v753, 0
        %757 = vmatprep.subr.bf16.mxu0 0
        %758 = vmatpush1.bf16.msra.mxu0 %v439
        %759 = vmatprep.subr.bf16.mxu0 0
        %760 = vmatpush1.bf16.msra.mxu0 %v440
        %761 = vmatprep.subr.bf16.mxu0 0
        %762 = vmatpush1.bf16.msra.mxu0 0
        %763 = vmatprep.subr.bf16.mxu0 0
        %764 = vmatpush1.bf16.msra.mxu0 0
        %765 = vmatprep.subr.bf16.mxu0 0
        %766 = vmatpush1.bf16.msra.mxu0 0
        %767 = vmatprep.subr.bf16.mxu0 0
        %768 = vmatpush1.bf16.msra.mxu0 0
        %769 = vmatprep.subr.bf16.mxu0 0
        %770 = vmatpush1.bf16.msra.mxu0 0
        %771 = vmatprep.subr.bf16.mxu0 0
        %772 = vmatpush1.bf16.msra.mxu0 0
        %773 = vmatprep.subr.bf16.mxu0 0
        %774 = vmatpush1.bf16.msra.mxu0 0
        %775 = vmatprep.subr.bf16.mxu0 0
        %776 = vmatpush1.bf16.msra.mxu0 0
        %777 = vmatprep.subr.bf16.mxu0 0
        %778 = vmatpush1.bf16.msra.mxu0 0
        %779 = vmatprep.subr.bf16.mxu0 0
        %780 = vmatpush1.bf16.msra.mxu0 0
        %781 = vmatprep.subr.bf16.mxu0 0
        %782 = vmatpush1.bf16.msra.mxu0 0
        %783 = vmatprep.subr.bf16.mxu0 0
        %784 = vmatpush1.bf16.msra.mxu0 0
        %785 = vmatprep.subr.bf16.mxu0 0
        %786 = vmatpush1.bf16.msra.mxu0 0
        %787 = vmatprep.subr.bf16.mxu0 0
        %788 = vmatpush1.bf16.msra.mxu0 0
        %789 = vmatprep.mubr.bf16.mxu0 0
        %790 = vmatmul.mubr.bf16.gmra.mrb[0].mxu0 %v755
        %v791 = vpop.f32.mrb[0].mxu0
        %v792 = vadd.f32 0.0, %v791
        %v793 = vpop.f32.mrb[0].mxu0
        %v794 = vpop.f32.mrb[0].mxu0
        %v795 = vpop.f32.mrb[0].mxu0
        %796 = vdwg.mxu0
        %v798 = vrot.slane %v792, 2
        %v800 = vadd.f32 %v419, %v798
        %v801 = vxor.u32 %v800, 2147483648
        %v802 = vmul.f32 %v801, 1.442695
        %v803 = vpow.pop %v802
        %v804 = vadd.f32 %v803, 1.0
        %v805 = vrcp.pop %v804
        %v806 = vmul.f32 1.0, %v805
        %v807 = vtanh.pop %v800
        %v809 = vrot.slane %v742, 6
        %v811 = vmul.f32 %v806, %v809
        %813 = vrot.lane.b32.xlu0 %v807, 64
        %v814 = vpop.permute.xlu0 %813
        %v816 = vmul.f32 %v806, %v814
        %818 = vrot.lane.b32.xlu0 %v816, 32
        %v819 = vpop.permute.xlu0 %818
        %v821 = vadd.f32 %v811, %v819
        %v822 = vtanh.pop %v821
        %824 = vrot.lane.b32.xlu0 %v822, 64
        %v825 = vpop.permute.xlu0 %824
        %v827 = vmul.f32 %v806, %v825
        %s828 = sadd.s32 %s515, 3
        %p829 = scmp.lt.s32.totalorder %s828, 7
        %s830 = scalar_select %p829, 1, 0
        %s831 = scvt.s32.f32 %s830
        %v832 = vstv %s831
        %v833 = vmul.f32 %v832, %v827
        %s834 = ssub.f32 1.0, %s831
        %v835 = vstv %s834
        %v836 = vmul.f32 %v835, %v736
        %v838 = vrot.slane %v836, 6
        %v840 = vadd.f32 %v833, %v838
        %v841 = vmul.f32 %v832, %v821
        %v842 = vmul.f32 %v835, %v742
        %v844 = vrot.slane %v842, 6
        %v846 = vadd.f32 %v841, %v844
        %848 = vrot.lane.b32.xlu0 %v827, 32
        %v849 = vpop.permute.xlu0 %848
        %vm851 = vcmask 261126
        %852 = vst.msk [vmem:[%s341] sm:$0xc0] %vm851, %v849
        %854 = vrot.lane.b32.xlu0 %v840, 32
        %v855 = vpop.permute.xlu0 %854
        %857 = vst.msk [vmem:[#allocation2 - $0x6] sm:$0xc0] %vm851, %v855
        %859 = vrot.lane.b32.xlu0 %v846, 96
        %v860 = vpop.permute.xlu0 %859
        %862 = vst.msk [vmem:[#allocation3 - $0x6] sm:$0xc0] %vm851, %v860
        %p863 = scmp.eq.s32.totalorder %s28, 1
        // Predicated region
        $region61: #{tpu_custom_call.1} parent=43 // pred_check
          %p864 = pneg %p863
        $region62: #{tpu_custom_call.1} parent=43 // pred_check_branch
          %866 = sbr.rel (%p864) target = $region64
        $region63: #{tpu_custom_call.1} parent=43 // pred_region
          %867 = vst.msk [vmem:[#allocation11 - $0x6] sm:$0xc0] %vm851, %v855
          %868 = vst.msk [vmem:[#allocation13 - $0x6] sm:$0xc0] %vm851, %v860
        $region64: #{tpu_custom_call.1} parent=43 // pred_fallthru
          _
        %s869 = sand.u32 %s167, 1
        %s870 = scalar_lea.sflag [#allocation6], %s869
        %s871 = sand.u32 %s167, 1
        %s872 = smul.addr %s871, 8
        %s873 = scalar_lea.vmem [#allocation10], %s872
        // Predicated region
        $region65: #{tpu_custom_call.1} parent=43 // pred_check
          %p874 = pneg %p177
        $region66: #{tpu_custom_call.1} parent=43 // pred_check_branch
          %876 = sbr.rel (%p874) target = $region68
        $region67: #{tpu_custom_call.1} parent=43 // pred_region
          %s878 = ssub.s32 128, 128
          %879 = vsyncadd %s870, %s878
          %s880 = smul.addr %s28, 128
          %s881 = scalar_lea.hbm %s6, %s880
          %s883 = sshll.u32 %s873, 4
          %s884 = int_to_ptr.vmem [resolvable:$true] %s883
          %886 = dma.vmem_to_hbm [thread:$0]  %s884, 128, %s881, %s870
        $region68: #{tpu_custom_call.1} parent=43 // pred_fallthru
          _
        // Predicated region
        $region69: #{tpu_custom_call.1} parent=43 // pred_check
          %p887 = pneg %p198
        $region70: #{tpu_custom_call.1} parent=43 // pred_check_branch
          %889 = sbr.rel (%p887) target = $region72
        $region71: #{tpu_custom_call.1} parent=43 // pred_region
          %s891 = ssub.s32 32, 32
          %892 = vsyncadd [#allocation12], %s891
          %s894 = sshll.u32 [#allocation11], 4
          %s895 = int_to_ptr.vmem [resolvable:$true] %s894
          %897 = dma.vmem_to_hbm [thread:$0]  %s895, 32, %s7, [#allocation12]
        $region72: #{tpu_custom_call.1} parent=43 // pred_fallthru
          _
        // Predicated region
        $region73: #{tpu_custom_call.1} parent=43 // pred_check
          %p898 = pneg %p219
        $region74: #{tpu_custom_call.1} parent=43 // pred_check_branch
          %900 = sbr.rel (%p898) target = $region76
        $region75: #{tpu_custom_call.1} parent=43 // pred_region
          %s902 = ssub.s32 32, 32
          %903 = vsyncadd [#allocation12], %s902
          %s905 = sshll.u32 [#allocation13], 4
          %s906 = int_to_ptr.vmem [resolvable:$true] %s905
          %908 = dma.vmem_to_hbm [thread:$0]  %s906, 32, %s8, [#allocation12]
        $region76: #{tpu_custom_call.1} parent=43 // pred_fallthru
          _
        // Predicated region
        $region77: #{tpu_custom_call.1} parent=43 // pred_check
          %p909 = pneg %p198
        $region78: #{tpu_custom_call.1} parent=43 // pred_check_branch
          %911 = sbr.rel (%p909) target = $region80
        $region79: #{tpu_custom_call.1} parent=43 // pred_region
          %912 = dma.done [#allocation12], 32
        $region80: #{tpu_custom_call.1} parent=43 // pred_fallthru
          _
        // Predicated region
        $region81: #{tpu_custom_call.1} parent=43 // pred_check
          %p913 = pneg %p219
        $region82: #{tpu_custom_call.1} parent=43 // pred_check_branch
          %915 = sbr.rel (%p913) target = $region84
        $region83: #{tpu_custom_call.1} parent=43 // pred_region
          %916 = dma.done [#allocation12], 32
        $region84: #{tpu_custom_call.1} parent=43 // pred_fallthru
          _
      $region44: #{tpu_custom_call.1} parent=5 // pred_fallthru
        _
      %p917 = scmp.le.s32.totalorder 2, %s23
      // Predicated region
      $region85: #{tpu_custom_call.1} parent=5 // pred_check
        %p918 = pneg %p917
      $region86: #{tpu_custom_call.1} parent=5 // pred_check_branch
        %920 = sbr.rel (%p918) target = $region88
      $region87: #{tpu_custom_call.1} parent=5 // pred_region
        %s921 = ssub.s32 %s23, 2
        // Predicated region
        $region89: #{tpu_custom_call.1} parent=87 // pred_check
          %p922 = pneg %p183
        $region90: #{tpu_custom_call.1} parent=87 // pred_check_branch
          %924 = sbr.rel (%p922) target = $region92
        $region91: #{tpu_custom_call.1} parent=87 // pred_region
          %s925 = sand.u32 %s168, 1
          %s926 = scalar_lea.sflag [#allocation6], %s925
          %s927 = sand.u32 %s168, 1
          %s928 = smul.addr %s927, 8
          %s929 = scalar_lea.vmem [#allocation10], %s928
          %930 = dma.done %s926, 128
        $region92: #{tpu_custom_call.1} parent=87 // pred_fallthru
          _
      $region88: #{tpu_custom_call.1} parent=5 // pred_fallthru
        _
    $region6: #{tpu_custom_call.1} parent=1 // loop_footer
      %s27 = sadd.s32 1, %s23
    $region7: #{tpu_custom_call.1} parent=1 // loop_footer_branch
      %22 = sbr.rel target = $region3
    $region8: #{tpu_custom_call.1} parent=1 // loop_exit
      _
    %931 = vsyncpa [#allocation5], 1
    %s932 = scalar_lea.sflag [#allocation5], 1
    %933 = vsyncpa %s932, 1
    %934 = vsyncpa [#allocation8], 1
    %935 = vsyncpa [#allocation6], 1
    %s936 = scalar_lea.sflag [#allocation6], 1
    %937 = vsyncpa %s936, 1
    %938 = vsyncpa [#allocation12], 1

</llo_original>
